<compile_context>
chip_gen: v7x
topology: tpu7x:2x2x1
jax: 0.10.0
libtpu: 0.0.40
codegen_flags: <defaults>
</compile_context>

<pallas_src>
import jax
import jax.numpy as jnp
from jax import lax
from jax.experimental import pallas as pl
from jax.experimental.pallas import tpu as pltpu

# ----- config (mirrors model_params / train_params) -------------------------
TOKEN_EMBED_LEN = 32
HIDDEN_LAYER_SIZES = (64, 32)
APPEND_DIFFERENCE = True
APPEND_HADAMARD = True
USE_LAYER_NORM = True
USE_BATCH_NORM = False   # TODO(synk): BatchNorm1d path not exercised (config off)
USE_BCE_LOSS = False     # False -> final Tanh, as in the PyTorch module
DROPOUT_KEEP_PROB = 1.0  # eval semantics: Dropout is identity
LN_EPS = 1e-5

MXU_DTYPE = jnp.bfloat16  # matmul-operand dtype: single-pass MXU throughput
LANE_ALIGN = 256          # lane multiple: fills the v6e/v7x MXU N dimension
MAX_BATCH_TILE = 2048     # lanes (batch rows) per grid step


def _round_up(x, m):
    return (x + m - 1) // m * m


def _choose_batch_tile(batch):
    """Tile (lanes/step) and padded batch. Multiple of LANE_ALIGN; capped so
    mid-size batches still get >= 2 grid steps (v7x has 2 TensorCores)."""
    b_al = _round_up(max(batch, 1), LANE_ALIGN)
    tb = min(MAX_BATCH_TILE, b_al)
    if b_al >= 2 * LANE_ALIGN:
        tb = min(tb, _round_up((b_al + 1) // 2, LANE_ALIGN))
    b_pad = _round_up(max(batch, 1), tb)
    return tb, b_pad


def _layernorm_fm(x, gamma, beta):
    """LayerNorm over the feature axis (axis 0) in feature-major layout.

    Single reduce pass (sum and sum-of-squares together, var = E[x^2]-mu^2)
    to halve XLU sublane-reduce work."""
    n = x.shape[0]
    mu = jnp.sum(x, axis=0, keepdims=True) * (1.0 / n)
    ex2 = jnp.sum(x * x, axis=0, keepdims=True) * (1.0 / n)
    var = jnp.maximum(ex2 - mu * mu, 0.0)
    return (x - mu) * lax.rsqrt(var + LN_EPS) * gamma + beta


def scorer_kernel(x_ref, w1_ref, w2_ref, p1_ref, p2_ref, b3_ref, out_ref):
    E = TOKEN_EMBED_LEN
    x_bf = x_ref[...]                                   # [2E, TB] bf16 stream
    icd = x_bf[:E, :].astype(jnp.float32)
    note = x_bf[E:, :].astype(jnp.float32)

    # Stacked activation [4E, TB] = (icd; note; |icd-note|; icd*note).
    # Sublane-axis concat is cheap in feature-major layout and feeds ONE fused
    # K=4E (=128) MXU matmul.  Elementwise feature math stays f32 (VPU).
    extra = jnp.concatenate([jnp.abs(icd - note), icd * note], axis=0)
    act = jnp.concatenate([x_bf, extra.astype(MXU_DTYPE)], axis=0)   # [4E, TB]

    p1 = p1_ref[...].astype(jnp.float32)   # [H1, 3] = (b1, gamma1, beta1)
    p2 = p2_ref[...].astype(jnp.float32)   # [H2, 4] = (b2, gamma2, beta2, w3)

    # hidden layer 1: Linear -> LayerNorm -> ReLU -> Dropout(identity, eval)
    h = jnp.dot(w1_ref[...], act, preferred_element_type=jnp.float32)  # [H1, TB]
    h = h + p1[:, 0:1]
    if USE_LAYER_NORM:
        h = _layernorm_fm(h, p1[:, 1:2], p1[:, 2:3])
    h = jnp.maximum(h, 0.0)

    # hidden layer 2: Linear -> LayerNorm -> ReLU -> Dropout(identity, eval)
    h = jnp.dot(w2_ref[...], h.astype(MXU_DTYPE),
                preferred_element_type=jnp.float32) + p2[:, 0:1]       # [H2, TB]
    if USE_LAYER_NORM:
        h = _layernorm_fm(h, p2[:, 1:2], p2[:, 2:3])
    h = jnp.maximum(h, 0.0)

    # output layer Linear(H2 -> 1): f32 VPU multiply + sublane reduce
    score = jnp.sum(h * p2[:, 3:4], axis=0, keepdims=True) + b3_ref[...]  # [1, TB]
    if not USE_BCE_LOSS:
        score = jnp.tanh(score)
    out_ref[...] = score.astype(out_ref.dtype)


def _encode_feature_major(token_embeds, ids):
    """Mean-pooled token-embedding lookup, produced feature-major [E, B]
    directly (avoids a wrapper-side transpose of a [B, E] activation slab)."""
    B, S = ids.shape
    emb_t = token_embeds.T                                     # [E, vocab] (tiny)
    g = jnp.take(emb_t, ids.reshape(-1), axis=1)               # [E, B*S]
    return jnp.mean(g.reshape(emb_t.shape[0], B, S), axis=2)   # [E, B]


def pointwise_scorer(note_ids, icd_ids, params):
    # TODO(synk): ICDEncoder / NoteEncoder definitions were not provided; using
    # mean-pooled token-embedding lookups as the encoders (plain-JAX glue).
    icd_fm = _encode_feature_major(params["icd_token_embeds"], icd_ids)     # [E, B]
    note_fm = _encode_feature_major(params["note_token_embeds"], note_ids)  # [E, B]

    E = TOKEN_EMBED_LEN
    H1, H2 = HIDDEN_LAYER_SIZES
    B = icd_fm.shape[1]

    tb, b_pad = _choose_batch_tile(B)
    n_tiles = b_pad // tb

    # single feature-major, lane-padded, bf16 batch stream: [2E, b_pad]
    x = jnp.concatenate([icd_fm, note_fm], axis=0)
    x = jnp.pad(x, ((0, 0), (0, b_pad - B))).astype(MXU_DTYPE)

    # bf16 MXU weights; packed f32 bias/LN/w3 vectors (one resident block each)
    w1 = params["w1"].astype(MXU_DTYPE)                                   # [H1, 4E]
    w2 = params["w2"].astype(MXU_DTYPE)                                   # [H2, H1]
    p1 = jnp.stack([params["b1"], params["ln1_g"], params["ln1_b"]], axis=1)       # [H1, 3]
    p2 = jnp.stack([params["b2"], params["ln2_g"], params["ln2_b"],
                    params["w3"][0]], axis=1)                                       # [H2, 4]
    b3 = params["b3"].reshape(1, 1).astype(jnp.float32)

    param_args = (w1, w2, p1, p2, b3)

    def resident_spec(arr):
        # whole (small) array as one block with a constant index_map -> stays
        # resident in VMEM for the whole grid.
        return pl.BlockSpec(arr.shape, lambda i: (0,) * arr.ndim)

    # Batch stream: lane-dense blocks along the grid.  If a profile ever shows
    # exposed DMA at step boundaries, add pipeline_mode=pl.Buffered(3) here
    # (VMEM is nowhere near binding).
    in_specs = ([pl.BlockSpec((2 * E, tb), lambda i: (0, i))]
                + [resident_spec(a) for a in param_args])

    weight_bytes = sum(int(a.size) * a.dtype.itemsize for a in param_args)
    cost = pl.CostEstimate(
        flops=2 * b_pad * (4 * E * H1 + H1 * H2 + H2),
        transcendentals=3 * b_pad,                  # 2x rsqrt + tanh per column
        bytes_accessed=2 * E * b_pad * 2 + b_pad * 4 + weight_bytes,
    )

    out = pl.pallas_call(
        scorer_kernel,
        out_shape=jax.ShapeDtypeStruct((1, b_pad), jnp.float32),
        grid_spec=pltpu.PrefetchScalarGridSpec(
            num_scalar_prefetch=0,
            grid=(n_tiles,),
            in_specs=in_specs,
            out_specs=pl.BlockSpec((1, tb), lambda i: (0, i)),
        ),
        compiler_params=pltpu.CompilerParams(
            dimension_semantics=("parallel",),      # batch axis -> v7x megacore
        ),
        cost_estimate=cost,
    )(x, *param_args)

    return out.reshape(-1)[:B]   # matches .reshape(-1) in the PyTorch forward


def init_params(key):
    E = TOKEN_EMBED_LEN
    from_size = 2 * E + sum(
        E for flag in (APPEND_HADAMARD, APPEND_DIFFERENCE) if flag)
    h1, h2 = HIDDEN_LAYER_SIZES

    keys = jax.random.split(key, 8)
    note_vocab, icd_vocab = 50, 40

    def linear(kw, kb, fan_in, fan_out):
        # nn.Linear-style init: W [out, in], b [out]
        bound = 1.0 / (fan_in ** 0.5)
        w = jax.random.uniform(kw, (fan_out, fan_in), jnp.float32, -bound, bound)
        b = jax.random.uniform(kb, (fan_out,), jnp.float32, -bound, bound)
        return w, b

    w1, b1 = linear(keys[0], keys[1], from_size, h1)
    w2, b2 = linear(keys[2], keys[3], h1, h2)
    w3, b3 = linear(keys[4], keys[5], h2, 1)

    return {
        "note_token_embeds": jax.random.normal(keys[6], (note_vocab, E), jnp.float32) * 0.1,
        "icd_token_embeds": jax.random.normal(keys[7], (icd_vocab, E), jnp.float32) * 0.1,
        "w1": w1, "b1": b1,
        "ln1_g": jnp.ones((h1,), jnp.float32), "ln1_b": jnp.zeros((h1,), jnp.float32),
        "w2": w2, "b2": b2,
        "ln2_g": jnp.ones((h2,), jnp.float32), "ln2_b": jnp.zeros((h2,), jnp.float32),
        "w3": w3, "b3": b3,
    }


def _reference(note_ids, icd_ids, params, mxu_dtype=jnp.float32):
    """Plain-JAX (batch-major, PyTorch-style) forward for correctness checks.

    mxu_dtype=bfloat16 mirrors the kernel's matmul-operand rounding exactly;
    mxu_dtype=float32 gives the exact PyTorch-f32 semantics."""
    def pool(embeds, ids):
        return jnp.mean(jnp.take(embeds, ids, axis=0), axis=1)

    icd = pool(params["icd_token_embeds"], icd_ids)
    note = pool(params["note_token_embeds"], note_ids)
    if mxu_dtype != jnp.float32:
        # the kernel streams the pooled embeddings to VMEM in bf16
        icd = icd.astype(mxu_dtype).astype(jnp.float32)
        note = note.astype(mxu_dtype).astype(jnp.float32)

    hidden = jnp.concatenate([icd, note], axis=1)
    if APPEND_DIFFERENCE:
        hidden = jnp.concatenate([hidden, jnp.abs(icd - note)], axis=1)
    if APPEND_HADAMARD:
        hidden = jnp.concatenate([hidden, icd * note], axis=1)

    def dense_ln_relu(xv, w, b, g, bt):
        y = jnp.dot(xv.astype(mxu_dtype), w.T.astype(mxu_dtype),
                    preferred_element_type=jnp.float32,
                    precision=lax.Precision.HIGHEST) + b.reshape(1, -1)
        if USE_LAYER_NORM:
            mu = jnp.mean(y, axis=-1, keepdims=True)
            var = jnp.mean((y - mu) ** 2, axis=-1, keepdims=True)
            y = (y - mu) * lax.rsqrt(var + LN_EPS) * g.reshape(1, -1) + bt.reshape(1, -1)
        return jnp.maximum(y, 0.0)

    h = dense_ln_relu(hidden, params["w1"], params["b1"], params["ln1_g"], params["ln1_b"])
    h = dense_ln_relu(h, params["w2"], params["b2"], params["ln2_g"], params["ln2_b"])
    y = jnp.dot(h, params["w3"].T, precision=lax.Precision.HIGHEST) + params["b3"].reshape(1, -1)
    if not USE_BCE_LOSS:
        y = jnp.tanh(y)
    return y.reshape(-1)


if __name__ == "__main__":
    key = jax.random.PRNGKey(0)
    k_params, k_note, k_icd = jax.random.split(key, 3)

    params = init_params(k_params)

    B, seq_note, seq_icd = 8, 12, 6
    note_ids = jax.random.randint(k_note, (B, seq_note), 0, 50)
    icd_ids = jax.random.randint(k_icd, (B, seq_icd), 0, 40)

    scores = jax.jit(pointwise_scorer)(note_ids, icd_ids, params)
    jax.block_until_ready(scores)
    assert scores.shape == (B,)

    # exact-semantics check: reference mirrors the kernel's bf16 MXU operands
    ref_bf16 = _reference(note_ids, icd_ids, params, mxu_dtype=MXU_DTYPE)
    assert jnp.allclose(scores, ref_bf16, atol=1e-3, rtol=1e-3), (
        float(jnp.max(jnp.abs(scores - ref_bf16))))
    # full-f32 (PyTorch) semantics: only bf16 MXU rounding separates the two
    ref_f32 = _reference(note_ids, icd_ids, params, mxu_dtype=jnp.float32)
    assert jnp.allclose(scores, ref_f32, atol=3e-2, rtol=3e-2), (
        float(jnp.max(jnp.abs(scores - ref_f32))))

    print("KERNEL_OK")
</pallas_src>

<mosaic_0001>
module attributes {stable_mosaic.version = 11 : i64} {
  func.func @scorer_kernel(%arg0: i32, %arg1: memref<64x256xbf16, #tpu.memory_space<vmem>>, %arg2: memref<64x128xbf16, #tpu.memory_space<vmem>>, %arg3: memref<32x64xbf16, #tpu.memory_space<vmem>>, %arg4: memref<64x3xf32, #tpu.memory_space<vmem>>, %arg5: memref<32x4xf32, #tpu.memory_space<vmem>>, %arg6: memref<1x1xf32, #tpu.memory_space<vmem>>, %arg7: memref<1x256xf32, #tpu.memory_space<vmem>>) attributes {dimension_semantics = [#tpu.dimension_semantics<parallel>], iteration_bounds = array<i64: 1>, scalar_prefetch = 0 : i64, scratch_operands = 0 : i64, tpu.core_type = #tpu.core_type<tc>, window_params = [{transform_indices = @transform_0, window_bounds = array<i64: 64, 256>}, {pipeline_mode = #tpu.pipeline_mode<synchronous>, transform_indices = @transform_1, window_bounds = array<i64: 64, 128>}, {pipeline_mode = #tpu.pipeline_mode<synchronous>, transform_indices = @transform_2, window_bounds = array<i64: 32, 64>}, {pipeline_mode = #tpu.pipeline_mode<synchronous>, transform_indices = @transform_3, window_bounds = array<i64: 64, 3>}, {pipeline_mode = #tpu.pipeline_mode<synchronous>, transform_indices = @transform_4, window_bounds = array<i64: 32, 4>}, {pipeline_mode = #tpu.pipeline_mode<synchronous>, transform_indices = @transform_5, window_bounds = array<i64: 1, 1>}, {transform_indices = @transform_6, window_bounds = array<i64: 1, 256>}]} {
    %c0 = arith.constant 0 : index
    %c0_0 = arith.constant 0 : index
    %0 = vector.load %arg1[%c0, %c0_0] : memref<64x256xbf16, #tpu.memory_space<vmem>>, vector<64x256xbf16>
    %1 = vector.extract_strided_slice %0 {offsets = [0, 0], sizes = [32, 256], strides = [1, 1]} : vector<64x256xbf16> to vector<32x256xbf16>
    %2 = arith.extf %1 : vector<32x256xbf16> to vector<32x256xf32>
    %3 = vector.extract_strided_slice %0 {offsets = [32, 0], sizes = [32, 256], strides = [1, 1]} : vector<64x256xbf16> to vector<32x256xbf16>
    %4 = arith.extf %3 : vector<32x256xbf16> to vector<32x256xf32>
    %5 = arith.subf %2, %4 : vector<32x256xf32>
    %6 = math.absf %5 : vector<32x256xf32>
    %7 = arith.mulf %2, %4 : vector<32x256xf32>
    %8 = tpu.concatenate %6, %7 in 0 : vector<32x256xf32>, vector<32x256xf32> -> vector<64x256xf32>
    %9 = arith.truncf %8 : vector<64x256xf32> to vector<64x256xbf16>
    %10 = tpu.concatenate %0, %9 in 0 : vector<64x256xbf16>, vector<64x256xbf16> -> vector<128x256xbf16>
    %c0_1 = arith.constant 0 : index
    %c0_2 = arith.constant 0 : index
    %11 = vector.load %arg4[%c0_1, %c0_2] : memref<64x3xf32, #tpu.memory_space<vmem>>, vector<64x3xf32>
    %c0_3 = arith.constant 0 : index
    %c0_4 = arith.constant 0 : index
    %12 = vector.load %arg5[%c0_3, %c0_4] : memref<32x4xf32, #tpu.memory_space<vmem>>, vector<32x4xf32>
    %c0_5 = arith.constant 0 : index
    %c0_6 = arith.constant 0 : index
    %13 = vector.load %arg2[%c0_5, %c0_6] : memref<64x128xbf16, #tpu.memory_space<vmem>>, vector<64x128xbf16>
    %cst = arith.constant dense<0.000000e+00> : vector<64x256xf32>
    %14 = tpu.matmul %13, %10, %cst {dimension_numbers = #tpu.dot_dimension_numbers<[1], [0], [0], [1], [0, 0, 1, 1], [], []>} : vector<64x128xbf16>, vector<128x256xbf16>, vector<64x256xf32> -> vector<64x256xf32>
    %15 = vector.extract_strided_slice %11 {offsets = [0, 0], sizes = [64, 1], strides = [1, 1]} : vector<64x3xf32> to vector<64x1xf32>
    %16 = vector.broadcast %15 : vector<64x1xf32> to vector<64x256xf32>
    %17 = arith.addf %14, %16 : vector<64x256xf32>
    %18 = vector.extract_strided_slice %11 {offsets = [0, 1], sizes = [64, 1], strides = [1, 1]} : vector<64x3xf32> to vector<64x1xf32>
    %19 = vector.extract_strided_slice %11 {offsets = [0, 2], sizes = [64, 1], strides = [1, 1]} : vector<64x3xf32> to vector<64x1xf32>
    %cst_7 = arith.constant dense<0.000000e+00> : vector<256xf32>
    %20 = vector.multi_reduction <add>, %17, %cst_7 [0] : vector<64x256xf32> to vector<256xf32>
    %21 = vector.shape_cast %20 : vector<256xf32> to vector<1x256xf32>
    %cst_8 = arith.constant 1.562500e-02 : f32
    %22 = vector.broadcast %cst_8 : f32 to vector<1x256xf32>
    %23 = arith.mulf %21, %22 : vector<1x256xf32>
    %24 = arith.mulf %17, %17 : vector<64x256xf32>
    %cst_9 = arith.constant dense<0.000000e+00> : vector<256xf32>
    %25 = vector.multi_reduction <add>, %24, %cst_9 [0] : vector<64x256xf32> to vector<256xf32>
    %26 = vector.shape_cast %25 : vector<256xf32> to vector<1x256xf32>
    %cst_10 = arith.constant 1.562500e-02 : f32
    %27 = vector.broadcast %cst_10 : f32 to vector<1x256xf32>
    %28 = arith.mulf %26, %27 : vector<1x256xf32>
    %29 = arith.mulf %23, %23 : vector<1x256xf32>
    %30 = arith.subf %28, %29 : vector<1x256xf32>
    %cst_11 = arith.constant 0.000000e+00 : f32
    %31 = vector.broadcast %cst_11 : f32 to vector<1x256xf32>
    %32 = arith.maximumf %30, %31 : vector<1x256xf32>
    %33 = vector.broadcast %23 : vector<1x256xf32> to vector<64x256xf32>
    %34 = arith.subf %17, %33 : vector<64x256xf32>
    %cst_12 = arith.constant 9.99999974E-6 : f32
    %35 = vector.broadcast %cst_12 : f32 to vector<1x256xf32>
    %36 = arith.addf %32, %35 : vector<1x256xf32>
    %37 = math.rsqrt %36 : vector<1x256xf32>
    %38 = vector.broadcast %37 : vector<1x256xf32> to vector<64x256xf32>
    %39 = arith.mulf %34, %38 : vector<64x256xf32>
    %40 = vector.broadcast %18 : vector<64x1xf32> to vector<64x256xf32>
    %41 = arith.mulf %39, %40 : vector<64x256xf32>
    %42 = vector.broadcast %19 : vector<64x1xf32> to vector<64x256xf32>
    %43 = arith.addf %41, %42 : vector<64x256xf32>
    %cst_13 = arith.constant 0.000000e+00 : f32
    %44 = vector.broadcast %cst_13 : f32 to vector<64x256xf32>
    %45 = arith.maximumf %43, %44 : vector<64x256xf32>
    %c0_14 = arith.constant 0 : index
    %c0_15 = arith.constant 0 : index
    %46 = vector.load %arg3[%c0_14, %c0_15] : memref<32x64xbf16, #tpu.memory_space<vmem>>, vector<32x64xbf16>
    %47 = arith.truncf %45 : vector<64x256xf32> to vector<64x256xbf16>
    %cst_16 = arith.constant dense<0.000000e+00> : vector<32x256xf32>
    %48 = tpu.matmul %46, %47, %cst_16 {dimension_numbers = #tpu.dot_dimension_numbers<[1], [0], [0], [1], [0, 0, 1, 1], [], []>} : vector<32x64xbf16>, vector<64x256xbf16>, vector<32x256xf32> -> vector<32x256xf32>
    %49 = vector.extract_strided_slice %12 {offsets = [0, 0], sizes = [32, 1], strides = [1, 1]} : vector<32x4xf32> to vector<32x1xf32>
    %50 = vector.broadcast %49 : vector<32x1xf32> to vector<32x256xf32>
    %51 = arith.addf %48, %50 : vector<32x256xf32>
    %52 = vector.extract_strided_slice %12 {offsets = [0, 1], sizes = [32, 1], strides = [1, 1]} : vector<32x4xf32> to vector<32x1xf32>
    %53 = vector.extract_strided_slice %12 {offsets = [0, 2], sizes = [32, 1], strides = [1, 1]} : vector<32x4xf32> to vector<32x1xf32>
    %cst_17 = arith.constant dense<0.000000e+00> : vector<256xf32>
    %54 = vector.multi_reduction <add>, %51, %cst_17 [0] : vector<32x256xf32> to vector<256xf32>
    %55 = vector.shape_cast %54 : vector<256xf32> to vector<1x256xf32>
    %cst_18 = arith.constant 3.125000e-02 : f32
    %56 = vector.broadcast %cst_18 : f32 to vector<1x256xf32>
    %57 = arith.mulf %55, %56 : vector<1x256xf32>
    %58 = arith.mulf %51, %51 : vector<32x256xf32>
    %cst_19 = arith.constant dense<0.000000e+00> : vector<256xf32>
    %59 = vector.multi_reduction <add>, %58, %cst_19 [0] : vector<32x256xf32> to vector<256xf32>
    %60 = vector.shape_cast %59 : vector<256xf32> to vector<1x256xf32>
    %cst_20 = arith.constant 3.125000e-02 : f32
    %61 = vector.broadcast %cst_20 : f32 to vector<1x256xf32>
    %62 = arith.mulf %60, %61 : vector<1x256xf32>
    %63 = arith.mulf %57, %57 : vector<1x256xf32>
    %64 = arith.subf %62, %63 : vector<1x256xf32>
    %cst_21 = arith.constant 0.000000e+00 : f32
    %65 = vector.broadcast %cst_21 : f32 to vector<1x256xf32>
    %66 = arith.maximumf %64, %65 : vector<1x256xf32>
    %67 = vector.broadcast %57 : vector<1x256xf32> to vector<32x256xf32>
    %68 = arith.subf %51, %67 : vector<32x256xf32>
    %cst_22 = arith.constant 9.99999974E-6 : f32
    %69 = vector.broadcast %cst_22 : f32 to vector<1x256xf32>
    %70 = arith.addf %66, %69 : vector<1x256xf32>
    %71 = math.rsqrt %70 : vector<1x256xf32>
    %72 = vector.broadcast %71 : vector<1x256xf32> to vector<32x256xf32>
    %73 = arith.mulf %68, %72 : vector<32x256xf32>
    %74 = vector.broadcast %52 : vector<32x1xf32> to vector<32x256xf32>
    %75 = arith.mulf %73, %74 : vector<32x256xf32>
    %76 = vector.broadcast %53 : vector<32x1xf32> to vector<32x256xf32>
    %77 = arith.addf %75, %76 : vector<32x256xf32>
    %cst_23 = arith.constant 0.000000e+00 : f32
    %78 = vector.broadcast %cst_23 : f32 to vector<32x256xf32>
    %79 = arith.maximumf %77, %78 : vector<32x256xf32>
    %80 = vector.extract_strided_slice %12 {offsets = [0, 3], sizes = [32, 1], strides = [1, 1]} : vector<32x4xf32> to vector<32x1xf32>
    %81 = vector.broadcast %80 : vector<32x1xf32> to vector<32x256xf32>
    %82 = arith.mulf %79, %81 : vector<32x256xf32>
    %cst_24 = arith.constant dense<0.000000e+00> : vector<256xf32>
    %83 = vector.multi_reduction <add>, %82, %cst_24 [0] : vector<32x256xf32> to vector<256xf32>
    %84 = vector.shape_cast %83 : vector<256xf32> to vector<1x256xf32>
    %c0_25 = arith.constant 0 : index
    %c0_26 = arith.constant 0 : index
    %85 = vector.load %arg6[%c0_25, %c0_26] : memref<1x1xf32, #tpu.memory_space<vmem>>, vector<1x1xf32>
    %86 = vector.broadcast %85 : vector<1x1xf32> to vector<1x256xf32>
    %87 = arith.addf %84, %86 : vector<1x256xf32>
    %88 = math.tanh %87 : vector<1x256xf32>
    %c0_27 = arith.constant 0 : index
    %c0_28 = arith.constant 0 : index
    %89 = vector.load %arg7[%c0_27, %c0_28] : memref<1x256xf32, #tpu.memory_space<vmem>>, vector<1x256xf32>
    tpu.vector_store %arg7[%c0_27, %c0_28], %88 {strides = array<i32>} : memref<1x256xf32, #tpu.memory_space<vmem>>, vector<1x256xf32>,
    return
  }
  func.func @transform_0(%arg0: i32) -> (i32, i32) {
    %c0_i32 = arith.constant 0 : i32
    %c0_i32_0 = arith.constant 0 : i32
    return %c0_i32, %arg0 : i32, i32
  }
  func.func @transform_1(%arg0: i32) -> (i32, i32) {
    %c0_i32 = arith.constant 0 : i32
    %c0_i32_0 = arith.constant 0 : i32
    %c0_i32_1 = arith.constant 0 : i32
    return %c0_i32, %c0_i32_0 : i32, i32
  }
  func.func @transform_2(%arg0: i32) -> (i32, i32) {
    %c0_i32 = arith.constant 0 : i32
    %c0_i32_0 = arith.constant 0 : i32
    %c0_i32_1 = arith.constant 0 : i32
    return %c0_i32, %c0_i32_0 : i32, i32
  }
  func.func @transform_3(%arg0: i32) -> (i32, i32) {
    %c0_i32 = arith.constant 0 : i32
    %c0_i32_0 = arith.constant 0 : i32
    %c0_i32_1 = arith.constant 0 : i32
    return %c0_i32, %c0_i32_0 : i32, i32
  }
  func.func @transform_4(%arg0: i32) -> (i32, i32) {
    %c0_i32 = arith.constant 0 : i32
    %c0_i32_0 = arith.constant 0 : i32
    %c0_i32_1 = arith.constant 0 : i32
    return %c0_i32, %c0_i32_0 : i32, i32
  }
  func.func @transform_5(%arg0: i32) -> (i32, i32) {
    %c0_i32 = arith.constant 0 : i32
    %c0_i32_0 = arith.constant 0 : i32
    %c0_i32_1 = arith.constant 0 : i32
    return %c0_i32, %c0_i32_0 : i32, i32
  }
  func.func @transform_6(%arg0: i32) -> (i32, i32) {
    %c0_i32 = arith.constant 0 : i32
    %c0_i32_0 = arith.constant 0 : i32
    return %c0_i32, %arg0 : i32, i32
  }
}

</mosaic_0001>

<llo_original>
// kernel: pointwise_scorer.1
$region0: #{pointwise_scorer.1}
  #allocation0 [shape = 'u32[]', space=smem, size = 0x4, offset = 0x4, fixed_abs, tag = 'smem constant byte address 0x4 - core index']
  #allocation1 [shape = 'u32[144,128]{1,0:T(1,128)}', space=vmem, size = 0x12000, scoped, tag = 'internal scratch']
  #allocation2 [shape = 'f32[1,1]{1,0:T(1,128)S(1)}', space=vmem, size = 0x200, scoped, tag = 'scoped memory for pointwise_scorer.1']
  %s0 = inlined_call_operand.vmem [shape: bf16[64,256], index: 0, kind: input, shape index: {}]
  %s1 = inlined_call_operand.vmem [shape: bf16[64,128], index: 1, kind: input, shape index: {}]
  %s2 = inlined_call_operand.vmem [shape: bf16[32,64], index: 2, kind: input, shape index: {}]
  %s3 = inlined_call_operand.vmem [shape: f32[64,3], index: 3, kind: input, shape index: {}]
  %s4 = inlined_call_operand.vmem [shape: f32[32,4], index: 4, kind: input, shape index: {}]
  %s5 = inlined_call_operand.<no memory space> [shape: f32[1,1], index: 5, kind: input, shape index: {}]
  %s6 = inlined_call_operand.vmem [shape: f32[1,256], index: 6, kind: output, shape index: {}]
  %s7 = sld [smem:[#allocation0]]
  $region34: #{pointwise_scorer.1} parent=0
    _
  %s9 = ssub.s32 1, %s7
  %s10 = scalar_select 0, %s9, %s7
  %v11 = vstv %s5
  %12 = vst [vmem:[#allocation2] sm:$0x1] %v11
  // Predicated region
  $region2: #{pointwise_scorer.1} parent=0 // pred_check
    _
  $region3: #{pointwise_scorer.1} parent=0 // pred_check_branch
    %14 = sbr.rel (0) target = $region5
  $region4: #{pointwise_scorer.1} parent=0 // pred_region
    _
  $region5: #{pointwise_scorer.1} parent=0 // pred_fallthru
    _
  // Predicated region
  $region6: #{pointwise_scorer.1} parent=0 // pred_check
    _
  $region7: #{pointwise_scorer.1} parent=0 // pred_check_branch
    %16 = sbr.rel (0) target = $region9
  $region8: #{pointwise_scorer.1} parent=0 // pred_region
    _
  $region9: #{pointwise_scorer.1} parent=0 // pred_fallthru
    _
  // Predicated region
  $region10: #{pointwise_scorer.1} parent=0 // pred_check
    _
  $region11: #{pointwise_scorer.1} parent=0 // pred_check_branch
    %18 = sbr.rel (0) target = $region13
  $region12: #{pointwise_scorer.1} parent=0 // pred_region
    _
  $region13: #{pointwise_scorer.1} parent=0 // pred_fallthru
    _
  // Predicated region
  $region14: #{pointwise_scorer.1} parent=0 // pred_check
    _
  $region15: #{pointwise_scorer.1} parent=0 // pred_check_branch
    %20 = sbr.rel (0) target = $region17
  $region16: #{pointwise_scorer.1} parent=0 // pred_region
    _
  $region17: #{pointwise_scorer.1} parent=0 // pred_fallthru
    _
  // Predicated region
  $region18: #{pointwise_scorer.1} parent=0 // pred_check
    _
  $region19: #{pointwise_scorer.1} parent=0 // pred_check_branch
    %22 = sbr.rel (0) target = $region21
  $region20: #{pointwise_scorer.1} parent=0 // pred_region
    _
  $region21: #{pointwise_scorer.1} parent=0 // pred_fallthru
    _
  // Predicated region
  $region22: #{pointwise_scorer.1} parent=0 // pred_check
    _
  $region23: #{pointwise_scorer.1} parent=0 // pred_check_branch
    %24 = sbr.rel (0) target = $region25
  $region24: #{pointwise_scorer.1} parent=0 // pred_region
    _
  $region25: #{pointwise_scorer.1} parent=0 // pred_fallthru
    _
  %v26 = vld [vmem:[%s0] sm:$0xff]
  %v27 = vld [vmem:[%s0 + $0x8] sm:$0xff]
  %v28 = vld [vmem:[%s0 + $0x10] sm:$0xff]
  %v29 = vld [vmem:[%s0 + $0x18] sm:$0xff]
  %v30 = vld [vmem:[%s0 + $0x20] sm:$0xff]
  %v31 = vld [vmem:[%s0 + $0x28] sm:$0xff]
  %v32 = vld [vmem:[%s0 + $0x30] sm:$0xff]
  %v33 = vld [vmem:[%s0 + $0x38] sm:$0xff]
  %v34 = vunpack.c.l.bf16 %v26
  %v35 = vunpack.c.h.bf16 %v26
  %v36 = vunpack.c.l.bf16 %v27
  %v37 = vunpack.c.h.bf16 %v27
  %v38 = vunpack.c.l.bf16 %v28
  %v39 = vunpack.c.h.bf16 %v28
  %v40 = vunpack.c.l.bf16 %v29
  %v41 = vunpack.c.h.bf16 %v29
  %v42 = vunpack.c.l.bf16 %v30
  %v43 = vunpack.c.h.bf16 %v30
  %v44 = vunpack.c.l.bf16 %v31
  %v45 = vunpack.c.h.bf16 %v31
  %v46 = vunpack.c.l.bf16 %v32
  %v47 = vunpack.c.h.bf16 %v32
  %v48 = vunpack.c.l.bf16 %v33
  %v49 = vunpack.c.h.bf16 %v33
  %v50 = vsub.f32 %v34, %v42
  %v51 = vsub.f32 %v35, %v43
  %v52 = vsub.f32 %v36, %v44
  %v53 = vsub.f32 %v37, %v45
  %v54 = vsub.f32 %v38, %v46
  %v55 = vsub.f32 %v39, %v47
  %v56 = vsub.f32 %v40, %v48
  %v57 = vsub.f32 %v41, %v49
  %v58 = vand.u32 2147483647, %v50
  %v59 = vand.u32 2147483647, %v51
  %v60 = vand.u32 2147483647, %v52
  %v61 = vand.u32 2147483647, %v53
  %v62 = vand.u32 2147483647, %v54
  %v63 = vand.u32 2147483647, %v55
  %v64 = vand.u32 2147483647, %v56
  %v65 = vand.u32 2147483647, %v57
  %v66 = vmul.f32 %v34, %v42
  %v67 = vmul.f32 %v35, %v43
  %v68 = vmul.f32 %v36, %v44
  %v69 = vmul.f32 %v37, %v45
  %v70 = vmul.f32 %v38, %v46
  %v71 = vmul.f32 %v39, %v47
  %v72 = vmul.f32 %v40, %v48
  %v73 = vmul.f32 %v41, %v49
  %v74 = vpack.c.bf16 %v60, %v58
  %v75 = vpack.c.bf16 %v61, %v59
  %v76 = vpack.c.bf16 %v64, %v62
  %v77 = vpack.c.bf16 %v65, %v63
  %v78 = vpack.c.bf16 %v68, %v66
  %v79 = vpack.c.bf16 %v69, %v67
  %v80 = vpack.c.bf16 %v72, %v70
  %v81 = vpack.c.bf16 %v73, %v71
  %v90 = vunpack.c.l.b16 %v26
  %v91 = vunpack.c.h.b16 %v26
  %v92 = vunpack.c.l.b16 %v27
  %v93 = vunpack.c.h.b16 %v27
  %v94 = vunpack.c.l.b16 %v28
  %v95 = vunpack.c.h.b16 %v28
  %v96 = vunpack.c.l.b16 %v29
  %v97 = vunpack.c.h.b16 %v29
  %v98 = vunpack.c.l.b16 %v30
  %v99 = vunpack.c.h.b16 %v30
  %v100 = vunpack.c.l.b16 %v31
  %v101 = vunpack.c.h.b16 %v31
  %v102 = vunpack.c.l.b16 %v32
  %v103 = vunpack.c.h.b16 %v32
  %v104 = vunpack.c.l.b16 %v33
  %v105 = vunpack.c.h.b16 %v33
  %v106 = vpack.c.b16 %v92, %v90
  %v107 = vpack.c.b16 %v93, %v91
  %v108 = vpack.c.b16 %v96, %v94
  %v109 = vpack.c.b16 %v97, %v95
  %v110 = vpack.c.b16 %v100, %v98
  %v111 = vpack.c.b16 %v101, %v99
  %v112 = vpack.c.b16 %v104, %v102
  %v113 = vpack.c.b16 %v105, %v103
  %v122 = vld [vmem:[%s3] sm:$0xff]
  %v123 = vld [vmem:[%s3 + $0x8] sm:$0xff]
  %v124 = vld [vmem:[%s3 + $0x10] sm:$0xff]
  %v125 = vld [vmem:[%s3 + $0x18] sm:$0xff]
  %v126 = vld [vmem:[%s3 + $0x20] sm:$0xff]
  %v127 = vld [vmem:[%s3 + $0x28] sm:$0xff]
  %v128 = vld [vmem:[%s3 + $0x30] sm:$0xff]
  %v129 = vld [vmem:[%s3 + $0x38] sm:$0xff]
  %v130 = vld [vmem:[%s4] sm:$0xff]
  %v131 = vld [vmem:[%s4 + $0x8] sm:$0xff]
  %v132 = vld [vmem:[%s4 + $0x10] sm:$0xff]
  %v133 = vld [vmem:[%s4 + $0x18] sm:$0xff]
  %v134 = vld [vmem:[%s1] sm:$0xf]
  %v135 = vld [vmem:[%s1 + $0x4] sm:$0xf]
  %v136 = vld [vmem:[%s1 + $0x8] sm:$0xf]
  %v137 = vld [vmem:[%s1 + $0xc] sm:$0xf]
  %v138 = vld [vmem:[%s1 + $0x10] sm:$0xf]
  %v139 = vld [vmem:[%s1 + $0x14] sm:$0xf]
  %v140 = vld [vmem:[%s1 + $0x18] sm:$0xf]
  %v141 = vld [vmem:[%s1 + $0x1c] sm:$0xf]
  %143 = vset.pattern.permute.xlu0 0
  %144 = vperm.xlu0 %143, %v122
  %v145 = vpop.permute.xlu0 %144
  %148 = vset.pattern.permute.xlu0 0
  %149 = vperm.xlu0 %148, %v123
  %v150 = vpop.permute.xlu0 %149
  %153 = vset.pattern.permute.xlu0 0
  %154 = vperm.xlu0 %153, %v124
  %v155 = vpop.permute.xlu0 %154
  %158 = vset.pattern.permute.xlu0 0
  %159 = vperm.xlu0 %158, %v125
  %v160 = vpop.permute.xlu0 %159
  %163 = vset.pattern.permute.xlu0 0
  %164 = vperm.xlu0 %163, %v126
  %v165 = vpop.permute.xlu0 %164
  %168 = vset.pattern.permute.xlu0 0
  %169 = vperm.xlu0 %168, %v127
  %v170 = vpop.permute.xlu0 %169
  %173 = vset.pattern.permute.xlu0 0
  %174 = vperm.xlu0 %173, %v128
  %v175 = vpop.permute.xlu0 %174
  %178 = vset.pattern.permute.xlu0 0
  %179 = vperm.xlu0 %178, %v129
  %v180 = vpop.permute.xlu0 %179
  %v190 = vunpack.c.l.b16 %v134
  %v191 = vunpack.c.l.b16 %v135
  %v192 = vunpack.c.l.b16 %v136
  %v193 = vunpack.c.l.b16 %v137
  %v194 = vunpack.c.l.b16 %v138
  %v195 = vunpack.c.l.b16 %v139
  %v196 = vunpack.c.l.b16 %v140
  %v197 = vunpack.c.l.b16 %v141
  %v198 = vpack.c.b16 %v191, %v190
  %v199 = vpack.c.b16 %v193, %v192
  %v200 = vpack.c.b16 %v195, %v194
  %v201 = vpack.c.b16 %v197, %v196
  %206 = vmatprep.subr.bf16.mxu0 %v107
  %207 = vmatpush1.bf16.msra.mxu0 %v106
  %208 = vmatprep.subr.bf16.mxu0 %v109
  %209 = vmatpush1.bf16.msra.mxu0 %v108
  %210 = vmatprep.subr.bf16.mxu0 %v111
  %211 = vmatpush1.bf16.msra.mxu0 %v110
  %212 = vmatprep.subr.bf16.mxu0 %v113
  %213 = vmatpush1.bf16.msra.mxu0 %v112
  %214 = vmatprep.subr.bf16.mxu0 %v75
  %215 = vmatpush1.bf16.msra.mxu0 %v74
  %216 = vmatprep.subr.bf16.mxu0 %v77
  %217 = vmatpush1.bf16.msra.mxu0 %v76
  %218 = vmatprep.subr.bf16.mxu0 %v79
  %219 = vmatpush1.bf16.msra.mxu0 %v78
  %220 = vmatprep.subr.bf16.mxu0 %v81
  %221 = vmatpush1.bf16.msra.mxu0 %v80
  %222 = vmatprep.subr.bf16.mxu0 0
  %223 = vmatpush1.bf16.msra.mxu0 0
  %224 = vmatprep.subr.bf16.mxu0 0
  %225 = vmatpush1.bf16.msra.mxu0 0
  %226 = vmatprep.subr.bf16.mxu0 0
  %227 = vmatpush1.bf16.msra.mxu0 0
  %228 = vmatprep.subr.bf16.mxu0 0
  %229 = vmatpush1.bf16.msra.mxu0 0
  %230 = vmatprep.subr.bf16.mxu0 0
  %231 = vmatpush1.bf16.msra.mxu0 0
  %232 = vmatprep.subr.bf16.mxu0 0
  %233 = vmatpush1.bf16.msra.mxu0 0
  %234 = vmatprep.subr.bf16.mxu0 0
  %235 = vmatpush1.bf16.msra.mxu0 0
  %236 = vmatprep.subr.bf16.mxu0 0
  %237 = vmatpush1.bf16.msra.mxu0 0
  %238 = vmatprep.mubr.bf16.mxu0 0
  %239 = vmatmul.mubr.bf16.gmra.mrb[0].mxu0 %v198
  %v240 = vpop.f32.mrb[0].mxu0
  %v241 = vadd.f32 %v145, %v240
  %v242 = vpop.f32.mrb[0].mxu0
  %v243 = vadd.f32 %v145, %v242
  %v244 = vpop.f32.mrb[0].mxu0
  %v245 = vadd.f32 %v150, %v244
  %v246 = vpop.f32.mrb[0].mxu0
  %v247 = vadd.f32 %v150, %v246
  %248 = vmatprep.mubr.bf16.mxu0 0
  %249 = vmatmul.mubr.bf16.gmra.mrb[0].mxu0 %v199
  %v250 = vpop.f32.mrb[0].mxu0
  %v251 = vadd.f32 %v155, %v250
  %v252 = vpop.f32.mrb[0].mxu0
  %v253 = vadd.f32 %v155, %v252
  %v254 = vpop.f32.mrb[0].mxu0
  %v255 = vadd.f32 %v160, %v254
  %v256 = vpop.f32.mrb[0].mxu0
  %v257 = vadd.f32 %v160, %v256
  %258 = vmatprep.mubr.bf16.mxu0 0
  %259 = vmatmul.mubr.bf16.gmra.mrb[0].mxu0 %v200
  %v260 = vpop.f32.mrb[0].mxu0
  %v261 = vadd.f32 %v165, %v260
  %v262 = vpop.f32.mrb[0].mxu0
  %v263 = vadd.f32 %v165, %v262
  %v264 = vpop.f32.mrb[0].mxu0
  %v265 = vadd.f32 %v170, %v264
  %v266 = vpop.f32.mrb[0].mxu0
  %v267 = vadd.f32 %v170, %v266
  %268 = vmatprep.mubr.bf16.mxu0 0
  %269 = vmatmul.mubr.bf16.gmra.mrb[0].mxu0 %v201
  %v270 = vpop.f32.mrb[0].mxu0
  %v271 = vadd.f32 %v175, %v270
  %v272 = vpop.f32.mrb[0].mxu0
  %v273 = vadd.f32 %v175, %v272
  %v274 = vpop.f32.mrb[0].mxu0
  %v275 = vadd.f32 %v180, %v274
  %v276 = vpop.f32.mrb[0].mxu0
  %v277 = vadd.f32 %v180, %v276
  %278 = vdwg.mxu0
  %v279 = vadd.f32 %v241, %v245
  %v280 = vadd.f32 %v279, %v251
  %v281 = vadd.f32 %v280, %v255
  %v282 = vadd.f32 %v281, %v261
  %v283 = vadd.f32 %v282, %v265
  %v284 = vadd.f32 %v283, %v271
  %v285 = vadd.f32 %v284, %v275
  %v286 = vrot.slane %v285, 4
  %v287 = vadd.f32 %v285, %v286
  %v288 = vrot.slane %v287, 2
  %v289 = vadd.f32 %v287, %v288
  %v290 = vrot.slane %v289, 1
  %v291 = vadd.f32 %v289, %v290
  %v292 = vadd.f32 %v243, %v247
  %v293 = vadd.f32 %v292, %v253
  %v294 = vadd.f32 %v293, %v257
  %v295 = vadd.f32 %v294, %v263
  %v296 = vadd.f32 %v295, %v267
  %v297 = vadd.f32 %v296, %v273
  %v298 = vadd.f32 %v297, %v277
  %v299 = vrot.slane %v298, 4
  %v300 = vadd.f32 %v298, %v299
  %v301 = vrot.slane %v300, 2
  %v302 = vadd.f32 %v300, %v301
  %v303 = vrot.slane %v302, 1
  %v304 = vadd.f32 %v302, %v303
  %v305 = vmul.f32 %v291, 0.015625
  %v306 = vmul.f32 %v304, 0.015625
  %v307 = vmul.f32 %v241, %v241
  %v308 = vmul.f32 %v243, %v243
  %v309 = vmul.f32 %v245, %v245
  %v310 = vmul.f32 %v247, %v247
  %v311 = vmul.f32 %v251, %v251
  %v312 = vmul.f32 %v253, %v253
  %v313 = vmul.f32 %v255, %v255
  %v314 = vmul.f32 %v257, %v257
  %v315 = vmul.f32 %v261, %v261
  %v316 = vmul.f32 %v263, %v263
  %v317 = vmul.f32 %v265, %v265
  %v318 = vmul.f32 %v267, %v267
  %v319 = vmul.f32 %v271, %v271
  %v320 = vmul.f32 %v273, %v273
  %v321 = vmul.f32 %v275, %v275
  %v322 = vmul.f32 %v277, %v277
  %v323 = vadd.f32 %v307, %v309
  %v324 = vadd.f32 %v323, %v311
  %v325 = vadd.f32 %v324, %v313
  %v326 = vadd.f32 %v325, %v315
  %v327 = vadd.f32 %v326, %v317
  %v328 = vadd.f32 %v327, %v319
  %v329 = vadd.f32 %v328, %v321
  %v330 = vrot.slane %v329, 4
  %v331 = vadd.f32 %v329, %v330
  %v332 = vrot.slane %v331, 2
  %v333 = vadd.f32 %v331, %v332
  %v334 = vrot.slane %v333, 1
  %v335 = vadd.f32 %v333, %v334
  %v336 = vadd.f32 %v308, %v310
  %v337 = vadd.f32 %v336, %v312
  %v338 = vadd.f32 %v337, %v314
  %v339 = vadd.f32 %v338, %v316
  %v340 = vadd.f32 %v339, %v318
  %v341 = vadd.f32 %v340, %v320
  %v342 = vadd.f32 %v341, %v322
  %v343 = vrot.slane %v342, 4
  %v344 = vadd.f32 %v342, %v343
  %v345 = vrot.slane %v344, 2
  %v346 = vadd.f32 %v344, %v345
  %v347 = vrot.slane %v346, 1
  %v348 = vadd.f32 %v346, %v347
  %v349 = vmul.f32 %v335, 0.015625
  %v350 = vmul.f32 %v348, 0.015625
  %v351 = vmul.f32 %v305, %v305
  %v352 = vmul.f32 %v306, %v306
  %v353 = vsub.f32 %v349, %v351
  %v354 = vsub.f32 %v350, %v352
  %v355 = vmax.f32 %v353, 0.0
  %v356 = vmax.f32 %v354, 0.0
  %v357 = vsub.f32 %v241, %v305
  %v358 = vsub.f32 %v243, %v306
  %v359 = vsub.f32 %v245, %v305
  %v360 = vsub.f32 %v247, %v306
  %v361 = vsub.f32 %v251, %v305
  %v362 = vsub.f32 %v253, %v306
  %v363 = vsub.f32 %v255, %v305
  %v364 = vsub.f32 %v257, %v306
  %v365 = vsub.f32 %v261, %v305
  %v366 = vsub.f32 %v263, %v306
  %v367 = vsub.f32 %v265, %v305
  %v368 = vsub.f32 %v267, %v306
  %v369 = vsub.f32 %v271, %v305
  %v370 = vsub.f32 %v273, %v306
  %v371 = vsub.f32 %v275, %v305
  %v372 = vsub.f32 %v277, %v306
  %v373 = vadd.f32 %v355, 1e-05
  %v374 = vadd.f32 %v356, 1e-05
  %v375 = vrsqrt.pop %v373
  %v376 = vrsqrt.pop %v374
  %v377 = vmul.f32 %v357, %v375
  %v378 = vmul.f32 %v358, %v376
  %v379 = vmul.f32 %v359, %v375
  %v380 = vmul.f32 %v360, %v376
  %v381 = vmul.f32 %v361, %v375
  %v382 = vmul.f32 %v362, %v376
  %v383 = vmul.f32 %v363, %v375
  %v384 = vmul.f32 %v364, %v376
  %v385 = vmul.f32 %v365, %v375
  %v386 = vmul.f32 %v366, %v376
  %v387 = vmul.f32 %v367, %v375
  %v388 = vmul.f32 %v368, %v376
  %v389 = vmul.f32 %v369, %v375
  %v390 = vmul.f32 %v370, %v376
  %v391 = vmul.f32 %v371, %v375
  %v392 = vmul.f32 %v372, %v376
  %393 = vset.pattern.permute.xlu0 1
  %394 = vperm.xlu0 %393, %v122
  %v395 = vpop.permute.xlu0 %394
  %397 = vset.pattern.permute.xlu0 1
  %398 = vperm.xlu0 %397, %v123
  %v399 = vpop.permute.xlu0 %398
  %401 = vset.pattern.permute.xlu0 1
  %402 = vperm.xlu0 %401, %v124
  %v403 = vpop.permute.xlu0 %402
  %405 = vset.pattern.permute.xlu0 1
  %406 = vperm.xlu0 %405, %v125
  %v407 = vpop.permute.xlu0 %406
  %409 = vset.pattern.permute.xlu0 1
  %410 = vperm.xlu0 %409, %v126
  %v411 = vpop.permute.xlu0 %410
  %413 = vset.pattern.permute.xlu0 1
  %414 = vperm.xlu0 %413, %v127
  %v415 = vpop.permute.xlu0 %414
  %417 = vset.pattern.permute.xlu0 1
  %418 = vperm.xlu0 %417, %v128
  %v419 = vpop.permute.xlu0 %418
  %421 = vset.pattern.permute.xlu0 1
  %422 = vperm.xlu0 %421, %v129
  %v423 = vpop.permute.xlu0 %422
  %v425 = vmul.f32 %v377, %v395
  %v426 = vmul.f32 %v378, %v395
  %v427 = vmul.f32 %v379, %v399
  %v428 = vmul.f32 %v380, %v399
  %v429 = vmul.f32 %v381, %v403
  %v430 = vmul.f32 %v382, %v403
  %v431 = vmul.f32 %v383, %v407
  %v432 = vmul.f32 %v384, %v407
  %v433 = vmul.f32 %v385, %v411
  %v434 = vmul.f32 %v386, %v411
  %v435 = vmul.f32 %v387, %v415
  %v436 = vmul.f32 %v388, %v415
  %v437 = vmul.f32 %v389, %v419
  %v438 = vmul.f32 %v390, %v419
  %v439 = vmul.f32 %v391, %v423
  %v440 = vmul.f32 %v392, %v423
  %441 = vset.pattern.permute.xlu0 2
  %442 = vperm.xlu0 %441, %v122
  %v443 = vpop.permute.xlu0 %442
  %445 = vset.pattern.permute.xlu0 2
  %446 = vperm.xlu0 %445, %v123
  %v447 = vpop.permute.xlu0 %446
  %449 = vset.pattern.permute.xlu0 2
  %450 = vperm.xlu0 %449, %v124
  %v451 = vpop.permute.xlu0 %450
  %453 = vset.pattern.permute.xlu0 2
  %454 = vperm.xlu0 %453, %v125
  %v455 = vpop.permute.xlu0 %454
  %457 = vset.pattern.permute.xlu0 2
  %458 = vperm.xlu0 %457, %v126
  %v459 = vpop.permute.xlu0 %458
  %461 = vset.pattern.permute.xlu0 2
  %462 = vperm.xlu0 %461, %v127
  %v463 = vpop.permute.xlu0 %462
  %465 = vset.pattern.permute.xlu0 2
  %466 = vperm.xlu0 %465, %v128
  %v467 = vpop.permute.xlu0 %466
  %469 = vset.pattern.permute.xlu0 2
  %470 = vperm.xlu0 %469, %v129
  %v471 = vpop.permute.xlu0 %470
  %v473 = vadd.f32 %v425, %v443
  %v474 = vadd.f32 %v426, %v443
  %v475 = vadd.f32 %v427, %v447
  %v476 = vadd.f32 %v428, %v447
  %v477 = vadd.f32 %v429, %v451
  %v478 = vadd.f32 %v430, %v451
  %v479 = vadd.f32 %v431, %v455
  %v480 = vadd.f32 %v432, %v455
  %v481 = vadd.f32 %v433, %v459
  %v482 = vadd.f32 %v434, %v459
  %v483 = vadd.f32 %v435, %v463
  %v484 = vadd.f32 %v436, %v463
  %v485 = vadd.f32 %v437, %v467
  %v486 = vadd.f32 %v438, %v467
  %v487 = vadd.f32 %v439, %v471
  %v488 = vadd.f32 %v440, %v471
  %v489 = vmax.f32 %v473, 0.0
  %v490 = vmax.f32 %v474, 0.0
  %v491 = vmax.f32 %v475, 0.0
  %v492 = vmax.f32 %v476, 0.0
  %v493 = vmax.f32 %v477, 0.0
  %v494 = vmax.f32 %v478, 0.0
  %v495 = vmax.f32 %v479, 0.0
  %v496 = vmax.f32 %v480, 0.0
  %v497 = vmax.f32 %v481, 0.0
  %v498 = vmax.f32 %v482, 0.0
  %v499 = vmax.f32 %v483, 0.0
  %v500 = vmax.f32 %v484, 0.0
  %v501 = vmax.f32 %v485, 0.0
  %v502 = vmax.f32 %v486, 0.0
  %v503 = vmax.f32 %v487, 0.0
  %v504 = vmax.f32 %v488, 0.0
  %v505 = vld [vmem:[%s2] sm:$0xf]
  %v506 = vld [vmem:[%s2 + $0x4] sm:$0xf]
  %v507 = vld [vmem:[%s2 + $0x8] sm:$0xf]
  %v508 = vld [vmem:[%s2 + $0xc] sm:$0xf]
  %v509 = vpack.c.bf16 %v491, %v489
  %v510 = vpack.c.bf16 %v492, %v490
  %v511 = vpack.c.bf16 %v495, %v493
  %v512 = vpack.c.bf16 %v496, %v494
  %v513 = vpack.c.bf16 %v499, %v497
  %v514 = vpack.c.bf16 %v500, %v498
  %v515 = vpack.c.bf16 %v503, %v501
  %v516 = vpack.c.bf16 %v504, %v502
  %518 = vset.pattern.permute.xlu0 0
  %519 = vperm.xlu0 %518, %v130
  %v520 = vpop.permute.xlu0 %519
  %523 = vset.pattern.permute.xlu0 0
  %524 = vperm.xlu0 %523, %v131
  %v525 = vpop.permute.xlu0 %524
  %528 = vset.pattern.permute.xlu0 0
  %529 = vperm.xlu0 %528, %v132
  %v530 = vpop.permute.xlu0 %529
  %533 = vset.pattern.permute.xlu0 0
  %534 = vperm.xlu0 %533, %v133
  %v535 = vpop.permute.xlu0 %534
  %v541 = vunpack.c.l.b16 %v505
  %v542 = vunpack.c.l.b16 %v506
  %v543 = vunpack.c.l.b16 %v507
  %v544 = vunpack.c.l.b16 %v508
  %v545 = vpack.c.b16 %v542, %v541
  %v546 = vpack.c.b16 %v544, %v543
  %vm547 = vcmask 523264
  %v549 = vsel %vm547, %v545, 0
  %v552 = vsel %vm547, %v546, 0
  %554 = vmatprep.subr.bf16.mxu0 %v510
  %555 = vmatpush1.bf16.msra.mxu0 %v509
  %556 = vmatprep.subr.bf16.mxu0 %v512
  %557 = vmatpush1.bf16.msra.mxu0 %v511
  %558 = vmatprep.subr.bf16.mxu0 %v514
  %559 = vmatpush1.bf16.msra.mxu0 %v513
  %560 = vmatprep.subr.bf16.mxu0 %v516
  %561 = vmatpush1.bf16.msra.mxu0 %v515
  %562 = vmatprep.subr.bf16.mxu0 0
  %563 = vmatpush1.bf16.msra.mxu0 0
  %564 = vmatprep.subr.bf16.mxu0 0
  %565 = vmatpush1.bf16.msra.mxu0 0
  %566 = vmatprep.subr.bf16.mxu0 0
  %567 = vmatpush1.bf16.msra.mxu0 0
  %568 = vmatprep.subr.bf16.mxu0 0
  %569 = vmatpush1.bf16.msra.mxu0 0
  %570 = vmatprep.subr.bf16.mxu0 0
  %571 = vmatpush1.bf16.msra.mxu0 0
  %572 = vmatprep.subr.bf16.mxu0 0
  %573 = vmatpush1.bf16.msra.mxu0 0
  %574 = vmatprep.subr.bf16.mxu0 0
  %575 = vmatpush1.bf16.msra.mxu0 0
  %576 = vmatprep.subr.bf16.mxu0 0
  %577 = vmatpush1.bf16.msra.mxu0 0
  %578 = vmatprep.subr.bf16.mxu0 0
  %579 = vmatpush1.bf16.msra.mxu0 0
  %580 = vmatprep.subr.bf16.mxu0 0
  %581 = vmatpush1.bf16.msra.mxu0 0
  %582 = vmatprep.subr.bf16.mxu0 0
  %583 = vmatpush1.bf16.msra.mxu0 0
  %584 = vmatprep.subr.bf16.mxu0 0
  %585 = vmatpush1.bf16.msra.mxu0 0
  %586 = vmatprep.mubr.bf16.mxu0 0
  %587 = vmatmul.mubr.bf16.gmra.mrb[0].mxu0 %v549
  %v588 = vpop.f32.mrb[0].mxu0
  %v589 = vadd.f32 %v520, %v588
  %v590 = vpop.f32.mrb[0].mxu0
  %v591 = vadd.f32 %v520, %v590
  %v592 = vpop.f32.mrb[0].mxu0
  %v593 = vadd.f32 %v525, %v592
  %v594 = vpop.f32.mrb[0].mxu0
  %v595 = vadd.f32 %v525, %v594
  %596 = vmatprep.mubr.bf16.mxu0 0
  %597 = vmatmul.mubr.bf16.gmra.mrb[0].mxu0 %v552
  %v598 = vpop.f32.mrb[0].mxu0
  %v599 = vadd.f32 %v530, %v598
  %v600 = vpop.f32.mrb[0].mxu0
  %v601 = vadd.f32 %v530, %v600
  %v602 = vpop.f32.mrb[0].mxu0
  %v603 = vadd.f32 %v535, %v602
  %v604 = vpop.f32.mrb[0].mxu0
  %v605 = vadd.f32 %v535, %v604
  %606 = vdwg.mxu0
  %v607 = vadd.f32 %v589, %v593
  %v608 = vadd.f32 %v607, %v599
  %v609 = vadd.f32 %v608, %v603
  %v610 = vrot.slane %v609, 4
  %v611 = vadd.f32 %v609, %v610
  %v612 = vrot.slane %v611, 2
  %v613 = vadd.f32 %v611, %v612
  %v614 = vrot.slane %v613, 1
  %v615 = vadd.f32 %v613, %v614
  %v616 = vadd.f32 %v591, %v595
  %v617 = vadd.f32 %v616, %v601
  %v618 = vadd.f32 %v617, %v605
  %v619 = vrot.slane %v618, 4
  %v620 = vadd.f32 %v618, %v619
  %v621 = vrot.slane %v620, 2
  %v622 = vadd.f32 %v620, %v621
  %v623 = vrot.slane %v622, 1
  %v624 = vadd.f32 %v622, %v623
  %v625 = vmul.f32 %v615, 0.03125
  %v626 = vmul.f32 %v624, 0.03125
  %v627 = vmul.f32 %v589, %v589
  %v628 = vmul.f32 %v591, %v591
  %v629 = vmul.f32 %v593, %v593
  %v630 = vmul.f32 %v595, %v595
  %v631 = vmul.f32 %v599, %v599
  %v632 = vmul.f32 %v601, %v601
  %v633 = vmul.f32 %v603, %v603
  %v634 = vmul.f32 %v605, %v605
  %v635 = vadd.f32 %v627, %v629
  %v636 = vadd.f32 %v635, %v631
  %v637 = vadd.f32 %v636, %v633
  %v638 = vrot.slane %v637, 4
  %v639 = vadd.f32 %v637, %v638
  %v640 = vrot.slane %v639, 2
  %v641 = vadd.f32 %v639, %v640
  %v642 = vrot.slane %v641, 1
  %v643 = vadd.f32 %v641, %v642
  %v644 = vadd.f32 %v628, %v630
  %v645 = vadd.f32 %v644, %v632
  %v646 = vadd.f32 %v645, %v634
  %v647 = vrot.slane %v646, 4
  %v648 = vadd.f32 %v646, %v647
  %v649 = vrot.slane %v648, 2
  %v650 = vadd.f32 %v648, %v649
  %v651 = vrot.slane %v650, 1
  %v652 = vadd.f32 %v650, %v651
  %v653 = vmul.f32 %v643, 0.03125
  %v654 = vmul.f32 %v652, 0.03125
  %v655 = vmul.f32 %v625, %v625
  %v656 = vmul.f32 %v626, %v626
  %v657 = vsub.f32 %v653, %v655
  %v658 = vsub.f32 %v654, %v656
  %v659 = vmax.f32 %v657, 0.0
  %v660 = vmax.f32 %v658, 0.0
  %v661 = vsub.f32 %v589, %v625
  %v662 = vsub.f32 %v591, %v626
  %v663 = vsub.f32 %v593, %v625
  %v664 = vsub.f32 %v595, %v626
  %v665 = vsub.f32 %v599, %v625
  %v666 = vsub.f32 %v601, %v626
  %v667 = vsub.f32 %v603, %v625
  %v668 = vsub.f32 %v605, %v626
  %v669 = vadd.f32 %v659, 1e-05
  %v670 = vadd.f32 %v660, 1e-05
  %v671 = vrsqrt.pop %v669
  %v672 = vrsqrt.pop %v670
  %v673 = vmul.f32 %v661, %v671
  %v674 = vmul.f32 %v662, %v672
  %v675 = vmul.f32 %v663, %v671
  %v676 = vmul.f32 %v664, %v672
  %v677 = vmul.f32 %v665, %v671
  %v678 = vmul.f32 %v666, %v672
  %v679 = vmul.f32 %v667, %v671
  %v680 = vmul.f32 %v668, %v672
  %681 = vset.pattern.permute.xlu0 1
  %682 = vperm.xlu0 %681, %v130
  %v683 = vpop.permute.xlu0 %682
  %685 = vset.pattern.permute.xlu0 1
  %686 = vperm.xlu0 %685, %v131
  %v687 = vpop.permute.xlu0 %686
  %689 = vset.pattern.permute.xlu0 1
  %690 = vperm.xlu0 %689, %v132
  %v691 = vpop.permute.xlu0 %690
  %693 = vset.pattern.permute.xlu0 1
  %694 = vperm.xlu0 %693, %v133
  %v695 = vpop.permute.xlu0 %694
  %v697 = vmul.f32 %v673, %v683
  %v698 = vmul.f32 %v674, %v683
  %v699 = vmul.f32 %v675, %v687
  %v700 = vmul.f32 %v676, %v687
  %v701 = vmul.f32 %v677, %v691
  %v702 = vmul.f32 %v678, %v691
  %v703 = vmul.f32 %v679, %v695
  %v704 = vmul.f32 %v680, %v695
  %705 = vset.pattern.permute.xlu0 2
  %706 = vperm.xlu0 %705, %v130
  %v707 = vpop.permute.xlu0 %706
  %709 = vset.pattern.permute.xlu0 2
  %710 = vperm.xlu0 %709, %v131
  %v711 = vpop.permute.xlu0 %710
  %713 = vset.pattern.permute.xlu0 2
  %714 = vperm.xlu0 %713, %v132
  %v715 = vpop.permute.xlu0 %714
  %717 = vset.pattern.permute.xlu0 2
  %718 = vperm.xlu0 %717, %v133
  %v719 = vpop.permute.xlu0 %718
  %v721 = vadd.f32 %v697, %v707
  %v722 = vadd.f32 %v698, %v707
  %v723 = vadd.f32 %v699, %v711
  %v724 = vadd.f32 %v700, %v711
  %v725 = vadd.f32 %v701, %v715
  %v726 = vadd.f32 %v702, %v715
  %v727 = vadd.f32 %v703, %v719
  %v728 = vadd.f32 %v704, %v719
  %v729 = vmax.f32 %v721, 0.0
  %v730 = vmax.f32 %v722, 0.0
  %v731 = vmax.f32 %v723, 0.0
  %v732 = vmax.f32 %v724, 0.0
  %v733 = vmax.f32 %v725, 0.0
  %v734 = vmax.f32 %v726, 0.0
  %v735 = vmax.f32 %v727, 0.0
  %v736 = vmax.f32 %v728, 0.0
  %737 = vset.pattern.permute.xlu0 3
  %738 = vperm.xlu0 %737, %v130
  %v739 = vpop.permute.xlu0 %738
  %741 = vset.pattern.permute.xlu0 3
  %742 = vperm.xlu0 %741, %v131
  %v743 = vpop.permute.xlu0 %742
  %745 = vset.pattern.permute.xlu0 3
  %746 = vperm.xlu0 %745, %v132
  %v747 = vpop.permute.xlu0 %746
  %749 = vset.pattern.permute.xlu0 3
  %750 = vperm.xlu0 %749, %v133
  %v751 = vpop.permute.xlu0 %750
  %v753 = vmul.f32 %v729, %v739
  %v754 = vmul.f32 %v730, %v739
  %v755 = vmul.f32 %v731, %v743
  %v756 = vmul.f32 %v732, %v743
  %v757 = vmul.f32 %v733, %v747
  %v758 = vmul.f32 %v734, %v747
  %v759 = vmul.f32 %v735, %v751
  %v760 = vmul.f32 %v736, %v751
  %v761 = vadd.f32 %v753, %v755
  %v762 = vadd.f32 %v761, %v757
  %v763 = vadd.f32 %v762, %v759
  %v764 = vrot.slane %v763, 4
  %v765 = vadd.f32 %v763, %v764
  %v766 = vrot.slane %v765, 2
  %v767 = vadd.f32 %v765, %v766
  %v768 = vrot.slane %v767, 1
  %v769 = vadd.f32 %v767, %v768
  %v770 = vadd.f32 %v754, %v756
  %v771 = vadd.f32 %v770, %v758
  %v772 = vadd.f32 %v771, %v760
  %v773 = vrot.slane %v772, 4
  %v774 = vadd.f32 %v772, %v773
  %v775 = vrot.slane %v774, 2
  %v776 = vadd.f32 %v774, %v775
  %v777 = vrot.slane %v776, 1
  %v778 = vadd.f32 %v776, %v777
  %v779 = vld [vmem:[#allocation2] sm:$0x1]
  %781 = vset.pattern.permute.xlu0 0
  %782 = vperm.xlu0 %781, %v779
  %v783 = vpop.permute.xlu0 %782
  %v785 = vlaneseq
  %v786 = vshrl.u32 %v785, 7
  %v787 = vsub.s32 0, %v786
  %v788 = vrot.slane %v783, %v787
  %v789 = vadd.f32 %v769, %v788
  %v790 = vadd.f32 %v778, %v788
  %v791 = vtanh.pop %v789
  %v792 = vtanh.pop %v790
  %v795 = vcombine.low %v791, %v792
  %v797 = vunpack.c.l.s4 1966171168
  %v798 = vunpack.c.0.s8 %v797
  %v799 = vlaneseq
  %v800 = vshrl.u32 %v799, 7
  %v801 = vsub.s32 %v798, %v800
  %v802 = vrot.slane %v795, %v801
  %v804 = vunpack.c.l.s4 1966171168
  %v805 = vunpack.c.0.s8 %v804
  %v806 = vlaneseq
  %v807 = vshrl.u32 %v806, 7
  %v808 = vsub.s32 %v805, %v807
  %v809 = vrot.slane %v802, %v808
  %v811 = vlaneseq
  %vm812 = vcmp.ge.s32.totalorder %v811, 0
  %vm813 = vcmp.lt.s32.totalorder %v811, 256
  %vm814 = vmand %vm812, %vm813
  %815 = vst.msk [vmem:[%s6] sm:$0x3] %vm814, %v809
  // Predicated region
  $region26: #{pointwise_scorer.1} parent=0 // pred_check
    _
  $region27: #{pointwise_scorer.1} parent=0 // pred_check_branch
    %817 = sbr.rel (0) target = $region29
  $region28: #{pointwise_scorer.1} parent=0 // pred_region
    _
  $region29: #{pointwise_scorer.1} parent=0 // pred_fallthru
    _
  // Predicated region
  $region30: #{pointwise_scorer.1} parent=0 // pred_check
    _
  $region31: #{pointwise_scorer.1} parent=0 // pred_check_branch
    %819 = sbr.rel (0) target = $region33
  $region32: #{pointwise_scorer.1} parent=0 // pred_region
    _
  $region33: #{pointwise_scorer.1} parent=0 // pred_fallthru
    _

</llo_original>
